<compile_context>
chip_gen: v6e
topology: v6e:2x2x1
jax: 0.10.0
libtpu: 0.0.40
codegen_flags: <defaults>
</compile_context>

<pallas_src>
import jax
import jax.numpy as jnp
import numpy as np
from jax import lax
from jax.experimental import pallas as pl
from jax.experimental.pallas import tpu as pltpu

LANE = 128
SUBLANE = 8
BLOCK_ROWS = 8192                  # 8192 * 128 * 4 B = 4 MiB per tiled block
ACC_ROWS = 128                     # pass-1 partial accumulator: (128,128) = 64 KiB
FUSED_PAD_ELEMS = ACC_ROWS * LANE  # fused path pads to 16384-element multiples
TILED_PAD_ELEMS = SUBLANE * LANE   # tiled path pads to 1024-element multiples
TILED_VMEM_LIMIT = 32 << 20        # <= physical VMEM on v5e/v6e/v7x


def _round_up(n, m):
    return ((n + m - 1) // m) * m


def _acc_rows_for(block_rows):
    for cand in (128, 64, 32, 16, 8):
        if block_rows % cand == 0:
            return cand
    return 8


def _vmem_capacity_bytes():
    try:
        info = pltpu.get_tpu_info()
        for name in ("vmem_capacity_bytes", "vmem_size_bytes"):
            val = getattr(info, name, None)
            if val:
                return int(val)
    except Exception:
        pass
    return 64 << 20   # conservative fallback: v7x per-core VMEM


def _default_fused_threshold_bytes():
    # in + out single-buffered must stay well under physical VMEM.
    return min(_vmem_capacity_bytes() // 4, 32 << 20)


def _scale_offset(params_ref, mn_x, mx_x):
    """Scalars so that  x*scale + offset == (normalize(x) - lo) / (hi - lo)."""
    mean = params_ref[0]
    inv_std = 1.0 / params_ref[1]
    a = (mn_x - mean) * inv_std
    b = (mx_x - mean) * inv_std
    lo = jnp.minimum(a, b)        # handles std < 0 (normalized min/max swap)
    hi = jnp.maximum(a, b)
    inv_range = 1.0 / (hi - lo)   # NOTE: max == min -> inf/NaN, as in reference
    scale = inv_std * inv_range
    offset = -(mean * inv_std + lo) * inv_range
    return scale, offset


def _fused_kernel(params_ref, x_ref, o_ref):
    """Small/medium tensors: raw min/max + single-FMA rescale in one launch."""
    x = x_ref[...]
    folded = x.reshape(-1, ACC_ROWS, LANE)            # rows % ACC_ROWS == 0
    mn = jnp.min(jnp.min(folded, axis=0))
    mx = jnp.max(jnp.max(folded, axis=0))
    scale, offset = _scale_offset(params_ref, mn, mx)
    o_ref[...] = x * scale + offset


def _make_minmax_kernel(block_rows, acc_rows, valid_rows_last):
    """Pass 1 (tiled): global min/max of raw x with a small VMEM accumulator."""

    def kernel(x_ref, mn_ref, mx_ref, acc_min, acc_max):
        i = pl.program_id(0)
        n = pl.num_programs(0)

        @pl.when(i == 0)
        def _():
            acc_min[...] = jnp.full_like(acc_min, jnp.inf)
            acc_max[...] = jnp.full_like(acc_max, -jnp.inf)

        def accumulate(x_for_min, x_for_max):
            acc_min[...] = jnp.minimum(
                acc_min[...],
                jnp.min(x_for_min.reshape(-1, acc_rows, LANE), axis=0))
            acc_max[...] = jnp.maximum(
                acc_max[...],
                jnp.max(x_for_max.reshape(-1, acc_rows, LANE), axis=0))

        if valid_rows_last == block_rows:
            xb = x_ref[...]
            accumulate(xb, xb)
        else:
            # Ragged row count (known statically): mask only the partial last
            # block; all other grid steps run the unmasked fast path.
            @pl.when(i != n - 1)
            def _():
                xb = x_ref[...]
                accumulate(xb, xb)

            @pl.when(i == n - 1)
            def _():
                xb = x_ref[...]
                row = lax.broadcasted_iota(jnp.int32, xb.shape, 0)
                valid = row < valid_rows_last
                accumulate(jnp.where(valid, xb, jnp.inf),
                           jnp.where(valid, xb, -jnp.inf))

        @pl.when(i == n - 1)
        def _():
            mn_ref[...] = jnp.full((1, 1), jnp.min(acc_min[...]), jnp.float32)
            mx_ref[...] = jnp.full((1, 1), jnp.max(acc_max[...]), jnp.float32)

    return kernel


def _rescale_kernel(params_ref, mn_ref, mx_ref, x_ref, o_ref):
    """Pass 2 (tiled): whole transform folded into one FMA per element."""
    scale, offset = _scale_offset(params_ref, mn_ref[0, 0], mx_ref[0, 0])
    o_ref[...] = x_ref[...] * scale + offset


def normalize_and_rescale(x, mean=0.0, std=1.0, *, fused_threshold_bytes=None):
    """x: any-shape tensor (e.g. NCHW). Returns the squeezed rescaled tensor."""
    orig_shape = x.shape
    flat = jnp.asarray(x).reshape(-1).astype(jnp.float32)
    total = int(flat.shape[0])

    # SMEM scalar params: no recompile per distinct (mean, std) pair.
    params = jnp.asarray([mean, std], dtype=jnp.float32)

    if fused_threshold_bytes is None:
        fused_threshold_bytes = _default_fused_threshold_bytes()
    small = _round_up(total, FUSED_PAD_ELEMS) * 4 <= fused_threshold_bytes

    pad_to = FUSED_PAD_ELEMS if small else TILED_PAD_ELEMS
    padded_total = _round_up(total, pad_to)
    if padded_total != total:
        # Edge-pad: pad values duplicate the last real element, so the global
        # min/max (and hence the rescale) are unchanged; sliced off on return.
        flat = jnp.pad(flat, (0, padded_total - total), mode="edge")
    rows = padded_total // LANE
    x2d = flat.reshape(rows, LANE)

    if small:
        # Single gridless launch: whole tensor resident in VMEM (single-
        # buffered), one HBM read + one HBM write.
        fused_vmem = max(16 << 20, 2 * padded_total * 4 + (4 << 20))
        out2d = pl.pallas_call(
            _fused_kernel,
            out_shape=jax.ShapeDtypeStruct((rows, LANE), jnp.float32),
            in_specs=[pl.BlockSpec(memory_space=pltpu.SMEM),
                      pl.BlockSpec(memory_space=pltpu.VMEM)],
            out_specs=pl.BlockSpec(memory_space=pltpu.VMEM),
            compiler_params=pltpu.CompilerParams(vmem_limit_bytes=fused_vmem),
            cost_estimate=pl.CostEstimate(
                flops=4 * padded_total, transcendentals=0,
                bytes_accessed=2 * padded_total * 4 + 8),
        )(params, x2d)
    else:
        block_rows = min(BLOCK_ROWS, rows)
        acc_rows = _acc_rows_for(block_rows)
        n_tiles = -(-rows // block_rows)
        valid_rows_last = rows - (n_tiles - 1) * block_rows

        # Pass 1: global min/max of raw x (sequential reduction; per-block
        # fold is pure VPU work into a 64 KiB accumulator).
        mn, mx = pl.pallas_call(
            _make_minmax_kernel(block_rows, acc_rows, valid_rows_last),
            out_shape=(jax.ShapeDtypeStruct((1, 1), jnp.float32),
                       jax.ShapeDtypeStruct((1, 1), jnp.float32)),
            grid=(n_tiles,),
            in_specs=[pl.BlockSpec((block_rows, LANE), lambda i: (i, 0))],
            out_specs=(pl.BlockSpec((1, 1), lambda i: (0, 0)),
                       pl.BlockSpec((1, 1), lambda i: (0, 0))),
            scratch_shapes=[pltpu.VMEM((acc_rows, LANE), jnp.float32),
                            pltpu.VMEM((acc_rows, LANE), jnp.float32)],
            compiler_params=pltpu.CompilerParams(
                dimension_semantics=("arbitrary",),
                vmem_limit_bytes=TILED_VMEM_LIMIT),
            cost_estimate=pl.CostEstimate(
                flops=2 * padded_total, transcendentals=0,
                bytes_accessed=padded_total * 4 + 8),
        )(x2d)

        # Pass 2: one FMA per element; scale/offset derived once per block
        # from SMEM scalars.
        out2d = pl.pallas_call(
            _rescale_kernel,
            out_shape=jax.ShapeDtypeStruct((rows, LANE), jnp.float32),
            grid=(n_tiles,),
            in_specs=[pl.BlockSpec(memory_space=pltpu.SMEM),   # params
                      pl.BlockSpec(memory_space=pltpu.SMEM),   # min(x)
                      pl.BlockSpec(memory_space=pltpu.SMEM),   # max(x)
                      pl.BlockSpec((block_rows, LANE), lambda i: (i, 0))],
            out_specs=pl.BlockSpec((block_rows, LANE), lambda i: (i, 0)),
            compiler_params=pltpu.CompilerParams(
                dimension_semantics=("parallel",),
                vmem_limit_bytes=TILED_VMEM_LIMIT),
            cost_estimate=pl.CostEstimate(
                flops=2 * padded_total, transcendentals=0,
                bytes_accessed=2 * padded_total * 4 + 16),
        )(params, mn, mx, x2d)

    out = out2d.reshape(-1)[:total].reshape(orig_shape)
    # PyTorch .squeeze(): drop all size-1 dims (glue, not hot path).
    return jnp.squeeze(out)


def _reference(x, mean, std):
    xn = (jnp.asarray(x).astype(jnp.float32) - mean) / std
    mn = jnp.min(xn)
    mx = jnp.max(xn)
    return jnp.squeeze((xn - mn) / (mx - mn))


def _check(x, mean, std, **kwargs):
    out = jax.block_until_ready(
        normalize_and_rescale(x, mean=mean, std=std, **kwargs))
    ref = jax.block_until_ready(_reference(x, mean, std))
    assert out.shape == ref.shape, (out.shape, ref.shape)
    np.testing.assert_allclose(np.asarray(out), np.asarray(ref),
                               rtol=1e-5, atol=1e-5)


if __name__ == "__main__":
    key = jax.random.PRNGKey(0)
    mean, std = 0.5, 2.0
    k1, k2, k3, k4 = jax.random.split(key, 4)

    # Primary small NCHW input (fused single-launch path).
    x_small = jax.random.normal(k1, (2, 4, 16, 16), dtype=jnp.float32) * 3.0 + 1.0
    _check(x_small, mean, std)

    # Ragged small shape (exercises edge-padding on the fused path).
    x_ragged = jax.random.normal(k2, (1, 3, 30, 29), dtype=jnp.float32)
    _check(x_ragged, mean, std)

    # 8 MiB input: now takes the fused path by default on every generation.
    x_big = jax.random.normal(k3, (2, 4, 512, 512), dtype=jnp.float32) * 2.0 - 0.3
    _check(x_big, mean, std)

    # Ragged mid-size input, fused path.
    x_big_ragged = jax.random.normal(k4, (3, 5, 300, 301), dtype=jnp.float32)
    _check(x_big_ragged, mean, std)

    # Force the tiled two-pass path (4 MiB blocks) to validate it as well:
    # exact block multiple, ragged (masked partial last block), and a single
    # small block.
    _check(x_big, mean, std, fused_threshold_bytes=0)
    _check(x_big_ragged, mean, std, fused_threshold_bytes=0)
    _check(x_small, mean, std, fused_threshold_bytes=0)

    print("KERNEL_OK")
</pallas_src>

<mosaic_0001>
module attributes {stable_mosaic.version = 11 : i64} {
  func.func @_fused_kernel(%arg0: memref<2xf32, #tpu.memory_space<smem>>, %arg1: memref<128x128xf32, #tpu.memory_space<vmem>>, %arg2: memref<128x128xf32, #tpu.memory_space<vmem>>) attributes {dimension_semantics = [], scalar_prefetch = 0 : i64, scratch_operands = 0 : i64, tpu.core_type = #tpu.core_type<tc>} {
    %c0 = arith.constant 0 : index
    %c0_0 = arith.constant 0 : index
    %0 = vector.load %arg1[%c0, %c0_0] : memref<128x128xf32, #tpu.memory_space<vmem>>, vector<128x128xf32>
    %1 = vector.shape_cast %0 : vector<128x128xf32> to vector<1x128x128xf32>
    %cst = arith.constant dense<0x7F800000> : vector<128x128xf32>
    %2 = vector.multi_reduction <minimumf>, %1, %cst [0] : vector<1x128x128xf32> to vector<128x128xf32>
    %3 = vector.shape_cast %2 : vector<128x128xf32> to vector<1x128x128xf32>
    %cst_1 = arith.constant dense<0x7F800000> : vector<1xf32>
    %4 = vector.multi_reduction <minimumf>, %3, %cst_1 [1, 2] : vector<1x128x128xf32> to vector<1xf32>
    %5 = vector.shape_cast %4 : vector<1xf32> to vector<1x1x1xf32>
    %6 = vector.extract %5[0, 0, 0] : f32 from vector<1x1x1xf32>
    %cst_2 = arith.constant dense<0xFF800000> : vector<128x128xf32>
    %7 = vector.multi_reduction <maximumf>, %1, %cst_2 [0] : vector<1x128x128xf32> to vector<128x128xf32>
    %8 = vector.shape_cast %7 : vector<128x128xf32> to vector<1x128x128xf32>
    %cst_3 = arith.constant dense<0xFF800000> : vector<1xf32>
    %9 = vector.multi_reduction <maximumf>, %8, %cst_3 [1, 2] : vector<1x128x128xf32> to vector<1xf32>
    %10 = vector.shape_cast %9 : vector<1xf32> to vector<1x1x1xf32>
    %11 = vector.extract %10[0, 0, 0] : f32 from vector<1x1x1xf32>
    %c0_4 = arith.constant 0 : index
    %12 = memref.load %arg0[%c0_4] : memref<2xf32, #tpu.memory_space<smem>>
    %c1 = arith.constant 1 : index
    %13 = memref.load %arg0[%c1] : memref<2xf32, #tpu.memory_space<smem>>
    %cst_5 = arith.constant 1.000000e+00 : f32
    %14 = arith.divf %cst_5, %13 : f32
    %15 = arith.subf %6, %12 : f32
    %16 = arith.mulf %15, %14 : f32
    %17 = arith.subf %11, %12 : f32
    %18 = arith.mulf %17, %14 : f32
    %19 = arith.minimumf %16, %18 : f32
    %20 = arith.maximumf %16, %18 : f32
    %21 = arith.subf %20, %19 : f32
    %cst_6 = arith.constant 1.000000e+00 : f32
    %22 = arith.divf %cst_6, %21 : f32
    %23 = arith.mulf %14, %22 : f32
    %24 = arith.mulf %12, %14 : f32
    %25 = arith.addf %24, %19 : f32
    %cst_7 = arith.constant 0.000000e+00 : f32
    %26 = arith.subf %cst_7, %25 : f32
    %27 = arith.mulf %26, %22 : f32
    %28 = vector.broadcast %23 : f32 to vector<128x128xf32>
    %29 = arith.mulf %0, %28 : vector<128x128xf32>
    %30 = vector.broadcast %27 : f32 to vector<128x128xf32>
    %31 = arith.addf %29, %30 : vector<128x128xf32>
    %c0_8 = arith.constant 0 : index
    %c0_9 = arith.constant 0 : index
    %32 = vector.load %arg2[%c0_8, %c0_9] : memref<128x128xf32, #tpu.memory_space<vmem>>, vector<128x128xf32>
    tpu.vector_store %arg2[%c0_8, %c0_9], %31 {strides = array<i32>} : memref<128x128xf32, #tpu.memory_space<vmem>>, vector<128x128xf32>,
    return
  }
}

</mosaic_0001>

<llo_original>
// kernel: tpu_custom_call.1
$region0: #{tpu_custom_call.1}
  #allocation0 [shape = 'u32[]', space=smem, size = 0x4, offset = 0x4, fixed_abs, tag = 'smem constant byte address 0x4 - core index']
  #allocation1 [shape = 'u32[144,128]{1,0:T(1,128)}', space=vmem, size = 0x12000, scoped, tag = 'internal scratch']
  %s0 = inlined_call_operand.hbm [shape: f32[2], index: 0, kind: input, shape index: {}]
  %s1 = inlined_call_operand.hbm [shape: f32[128,128], index: 1, kind: input, shape index: {}]
  %s2 = inlined_call_operand.hbm [shape: f32[128,128], index: 2, kind: output, shape index: {}]
  %s3 = sld [smem:[#allocation0]]
  $region26: #{tpu_custom_call.1} parent=0
    _
  %s5 = ssub.s32 1, %s3
  %s6 = scalar_select 0, %s5, %s3
  $region1: #{tpu_custom_call.1} parent=0
    #allocation2 [shape = 'u8[512]{0}', space=smem, size = 0x200, scoped, tag = 'input window, operand 0, single buffered']
    #allocation3 [shape = 's32[1]{0}', space=sflag, size = 0x4, scoped, tag = 'scoped memory for tpu_custom_call.1']
    #allocation4 [shape = 's32[1]{0}', space=sflag, size = 0x4, scoped, tag = 'scoped memory for tpu_custom_call.1']
    #allocation5 [shape = 's32[1]{0}', space=sflag, size = 0x4, scoped, tag = 'scoped memory for tpu_custom_call.1']
    #allocation6 [shape = 'u8[65536]{0}', space=vmem, size = 0x10000, scoped, tag = 'input window, operand 1, single buffered']
    #allocation7 [shape = 'u8[65536]{0}', space=vmem, size = 0x10000, scoped, tag = 'output window, operand 0, single buffered']
    %7 = vsyncpa [#allocation5], 0
    %8 = vsyncpa [#allocation3], 0
    %9 = vsyncpa [#allocation4], 0
    // Predicated region
    $region2: #{tpu_custom_call.1} parent=1 // pred_check
      _
    $region3: #{tpu_custom_call.1} parent=1 // pred_check_branch
      %11 = sbr.rel (0) target = $region5
    $region4: #{tpu_custom_call.1} parent=1 // pred_region
      %s13 = ssub.s32 16, 16
      %14 = vsyncadd [#allocation5], %s13
      %17 = dma.hbm_to_smem %s0, 16, [#allocation2], [#allocation5]
    $region5: #{tpu_custom_call.1} parent=1 // pred_fallthru
      _
    // Predicated region
    $region6: #{tpu_custom_call.1} parent=1 // pred_check
      _
    $region7: #{tpu_custom_call.1} parent=1 // pred_check_branch
      %19 = sbr.rel (0) target = $region9
    $region8: #{tpu_custom_call.1} parent=1 // pred_region
      %s21 = ssub.s32 2048, 2048
      %22 = vsyncadd [#allocation3], %s21
      %s23 = sshll.u32 [#allocation6], 4
      %s24 = int_to_ptr.vmem [resolvable:$true] %s23
      %29 = dma.hbm_to_vmem [thread:$0]  %s1, 2048, %s24, [#allocation3], 128, 128, 8
    $region9: #{tpu_custom_call.1} parent=1 // pred_fallthru
      _
    // Predicated region
    $region10: #{tpu_custom_call.1} parent=1 // pred_check
      _
    $region11: #{tpu_custom_call.1} parent=1 // pred_check_branch
      %31 = sbr.rel (0) target = $region13
    $region12: #{tpu_custom_call.1} parent=1 // pred_region
      %32 = dma.done [#allocation5], 16
    $region13: #{tpu_custom_call.1} parent=1 // pred_fallthru
      _
    // Predicated region
    $region14: #{tpu_custom_call.1} parent=1 // pred_check
      _
    $region15: #{tpu_custom_call.1} parent=1 // pred_check_branch
      %34 = sbr.rel (0) target = $region17
    $region16: #{tpu_custom_call.1} parent=1 // pred_region
      %35 = dma.done [#allocation3], 2048
    $region17: #{tpu_custom_call.1} parent=1 // pred_fallthru
      _
    %36 = sfence
    %v37 = vld [vmem:[#allocation6] sm:$0xff]
    %v38 = vld [vmem:[#allocation6 + $0x8] sm:$0xff]
    %v39 = vld [vmem:[#allocation6 + $0x10] sm:$0xff]
    %v40 = vld [vmem:[#allocation6 + $0x18] sm:$0xff]
    %v41 = vld [vmem:[#allocation6 + $0x20] sm:$0xff]
    %v42 = vld [vmem:[#allocation6 + $0x28] sm:$0xff]
    %v43 = vld [vmem:[#allocation6 + $0x30] sm:$0xff]
    %v44 = vld [vmem:[#allocation6 + $0x38] sm:$0xff]
    %v45 = vld [vmem:[#allocation6 + $0x40] sm:$0xff]
    %v46 = vld [vmem:[#allocation6 + $0x48] sm:$0xff]
    %v47 = vld [vmem:[#allocation6 + $0x50] sm:$0xff]
    %v48 = vld [vmem:[#allocation6 + $0x58] sm:$0xff]
    %v49 = vld [vmem:[#allocation6 + $0x60] sm:$0xff]
    %v50 = vld [vmem:[#allocation6 + $0x68] sm:$0xff]
    %v51 = vld [vmem:[#allocation6 + $0x70] sm:$0xff]
    %v52 = vld [vmem:[#allocation6 + $0x78] sm:$0xff]
    %v53 = vmin.f32 %v37, %v41
    %v54 = vmin.f32 %v38, %v42
    %v55 = vmin.f32 %v39, %v43
    %v56 = vmin.f32 %v40, %v44
    %v57 = vmin.f32 %v53, %v45
    %v58 = vmin.f32 %v54, %v46
    %v59 = vmin.f32 %v55, %v47
    %v60 = vmin.f32 %v56, %v48
    %v61 = vmin.f32 %v57, %v49
    %v62 = vmin.f32 %v58, %v50
    %v63 = vmin.f32 %v59, %v51
    %v64 = vmin.f32 %v60, %v52
    %v65 = vmin.f32 %v61, %v62
    %v66 = vmin.f32 %v63, %v64
    %v67 = vmin.f32 %v65, %v66
    %68 = vmin.xlane.f32.xlu0 %v67
    %v69 = vpop.xlane.xlu0 %68
    %v70 = vrot.slane %v69, 4
    %v71 = vmin.f32 %v69, %v70
    %v72 = vrot.slane %v71, 2
    %v73 = vmin.f32 %v71, %v72
    %v74 = vrot.slane %v73, 1
    %v75 = vmin.f32 %v73, %v74
    %s76 = vtos %v75
    %v77 = vmax.f32 %v37, %v41
    %v78 = vmax.f32 %v38, %v42
    %v79 = vmax.f32 %v39, %v43
    %v80 = vmax.f32 %v40, %v44
    %v81 = vmax.f32 %v77, %v45
    %v82 = vmax.f32 %v78, %v46
    %v83 = vmax.f32 %v79, %v47
    %v84 = vmax.f32 %v80, %v48
    %v85 = vmax.f32 %v81, %v49
    %v86 = vmax.f32 %v82, %v50
    %v87 = vmax.f32 %v83, %v51
    %v88 = vmax.f32 %v84, %v52
    %v89 = vmax.f32 %v85, %v86
    %v90 = vmax.f32 %v87, %v88
    %v91 = vmax.f32 %v89, %v90
    %92 = vmax.xlane.f32.xlu0 %v91
    %v93 = vpop.xlane.xlu0 %92
    %v94 = vrot.slane %v93, 4
    %v95 = vmax.f32 %v93, %v94
    %v96 = vrot.slane %v95, 2
    %v97 = vmax.f32 %v95, %v96
    %v98 = vrot.slane %v97, 1
    %v99 = vmax.f32 %v97, %v98
    %s100 = vtos %v99
    %s101 = sld [smem:[#allocation2]]
    %s102 = sld [smem:[#allocation2 + $0x1]]
    %v103 = vstv %s102
    %v104 = vrcp.pop %v103
    %s105 = vtos %v104
    %s106 = ssub.f32 %s76, %s101
    %s107 = smul.f32 %s106, %s105
    %s108 = ssub.f32 %s100, %s101
    %s109 = smul.f32 %s108, %s105
    %s110 = smin.f32 %s107, %s109
    %s111 = smax.f32 %s107, %s109
    %s112 = ssub.f32 %s111, %s110
    %v113 = vstv %s112
    %v114 = vrcp.pop %v113
    %s115 = vtos %v114
    %s116 = smul.f32 %s105, %s115
    %s117 = smul.f32 %s101, %s105
    %s118 = sadd.f32 %s117, %s110
    %s119 = ssub.f32 0.0, %s118
    %s120 = smul.f32 %s119, %s115
    %v121 = vstv %s116
    %v122 = vmul.f32 %v37, %v121
    %v123 = vmul.f32 %v38, %v121
    %v124 = vmul.f32 %v39, %v121
    %v125 = vmul.f32 %v40, %v121
    %v126 = vmul.f32 %v41, %v121
    %v127 = vmul.f32 %v42, %v121
    %v128 = vmul.f32 %v43, %v121
    %v129 = vmul.f32 %v44, %v121
    %v130 = vmul.f32 %v45, %v121
    %v131 = vmul.f32 %v46, %v121
    %v132 = vmul.f32 %v47, %v121
    %v133 = vmul.f32 %v48, %v121
    %v134 = vmul.f32 %v49, %v121
    %v135 = vmul.f32 %v50, %v121
    %v136 = vmul.f32 %v51, %v121
    %v137 = vmul.f32 %v52, %v121
    %v138 = vstv %s120
    %v139 = vadd.f32 %v122, %v138
    %v140 = vadd.f32 %v123, %v138
    %v141 = vadd.f32 %v124, %v138
    %v142 = vadd.f32 %v125, %v138
    %v143 = vadd.f32 %v126, %v138
    %v144 = vadd.f32 %v127, %v138
    %v145 = vadd.f32 %v128, %v138
    %v146 = vadd.f32 %v129, %v138
    %v147 = vadd.f32 %v130, %v138
    %v148 = vadd.f32 %v131, %v138
    %v149 = vadd.f32 %v132, %v138
    %v150 = vadd.f32 %v133, %v138
    %v151 = vadd.f32 %v134, %v138
    %v152 = vadd.f32 %v135, %v138
    %v153 = vadd.f32 %v136, %v138
    %v154 = vadd.f32 %v137, %v138
    %155 = vst [vmem:[#allocation7] sm:$0xff] %v139
    %156 = vst [vmem:[#allocation7 + $0x8] sm:$0xff] %v140
    %157 = vst [vmem:[#allocation7 + $0x10] sm:$0xff] %v141
    %158 = vst [vmem:[#allocation7 + $0x18] sm:$0xff] %v142
    %159 = vst [vmem:[#allocation7 + $0x20] sm:$0xff] %v143
    %160 = vst [vmem:[#allocation7 + $0x28] sm:$0xff] %v144
    %161 = vst [vmem:[#allocation7 + $0x30] sm:$0xff] %v145
    %162 = vst [vmem:[#allocation7 + $0x38] sm:$0xff] %v146
    %163 = vst [vmem:[#allocation7 + $0x40] sm:$0xff] %v147
    %164 = vst [vmem:[#allocation7 + $0x48] sm:$0xff] %v148
    %165 = vst [vmem:[#allocation7 + $0x50] sm:$0xff] %v149
    %166 = vst [vmem:[#allocation7 + $0x58] sm:$0xff] %v150
    %167 = vst [vmem:[#allocation7 + $0x60] sm:$0xff] %v151
    %168 = vst [vmem:[#allocation7 + $0x68] sm:$0xff] %v152
    %169 = vst [vmem:[#allocation7 + $0x70] sm:$0xff] %v153
    %170 = vst [vmem:[#allocation7 + $0x78] sm:$0xff] %v154
    // Predicated region
    $region18: #{tpu_custom_call.1} parent=1 // pred_check
      _
    $region19: #{tpu_custom_call.1} parent=1 // pred_check_branch
      %172 = sbr.rel (0) target = $region21
    $region20: #{tpu_custom_call.1} parent=1 // pred_region
      %s174 = ssub.s32 2048, 2048
      %175 = vsyncadd [#allocation4], %s174
      %s176 = sshll.u32 [#allocation7], 4
      %s177 = int_to_ptr.vmem [resolvable:$true] %s176
      %182 = dma.vmem_to_hbm [thread:$0]  %s177, 2048, %s2, [#allocation4], 128, 128, 8
    $region21: #{tpu_custom_call.1} parent=1 // pred_fallthru
      _
    // Predicated region
    $region22: #{tpu_custom_call.1} parent=1 // pred_check
      _
    $region23: #{tpu_custom_call.1} parent=1 // pred_check_branch
      %184 = sbr.rel (0) target = $region25
    $region24: #{tpu_custom_call.1} parent=1 // pred_region
      %185 = dma.done [#allocation4], 2048
    $region25: #{tpu_custom_call.1} parent=1 // pred_fallthru
      _
    %186 = vsyncpa [#allocation3], 1
    %187 = vsyncpa [#allocation4], 1
    %188 = vsyncpa [#allocation5], 1

</llo_original>
